<compile_context>
chip_gen: v7x
topology: tpu7x:2x2x1
jax: 0.10.0
libtpu: 0.0.40
codegen_flags: <defaults>
</compile_context>

<pallas_src>
import jax
import jax.numpy as jnp
from jax.experimental import pallas as pl
from jax.experimental.pallas import tpu as pltpu

BN_EPS = 1e-5
D1, D2, D3 = 256, 128, 64          # hidden widths of MyModel


def mlp_kernel(x_ref, w1_ref, w2_ref, w3_ref, slab_ref, o_ref):
    tb, b, d = x_ref.shape
    m_rows = tb * b

    x = x_ref[...].reshape(m_rows, d)            # merge TB sub-batches -> (M, D)
    slab = slab_ref[...]                         # (8, 256) packed small params

    g1, be1 = slab[0:1, :], slab[1:2, :]         # (1, 256) bn1 gamma/beta
    g2, be2 = slab[2:3, :D2], slab[3:4, :D2]     # (1, 128) bn2 gamma/beta
    b3 = slab[4:5, :D3]                          # (1, 64)  layer3 bias
    w4r = slab[5:6, :D3]                         # (1, 64)  output weight row
    b4 = slab[5:6, D3:D3 + 1]                    # (1, 1)   output bias

    def bn_relu(h, gamma, beta, n):
        # Per-sub-batch (PyTorch training-mode) BatchNorm1d + ReLU folded into
        # a single scale/shift FMA.  Centered variance (no cancellation).
        hb = h.reshape(tb, b, n)                          # (TB, B, N)
        mu = jnp.mean(hb, axis=1, keepdims=True)          # (TB, 1, N)
        c = hb - mu
        var = jnp.mean(c * c, axis=1, keepdims=True)
        scale = jax.lax.rsqrt(var + BN_EPS) * gamma       # (TB, 1, N)
        return jnp.maximum(c * scale + beta, 0.0).reshape(m_rows, n)

    # Linear biases b1/b2 are omitted: a per-feature bias followed by
    # training-mode BN is cancelled exactly by the mean subtraction.
    h = jnp.dot(x, w1_ref[...], preferred_element_type=jnp.float32)   # (M, 256)
    h = bn_relu(h, g1, be1, D1)
    h = jnp.dot(h, w2_ref[...], preferred_element_type=jnp.float32)   # (M, 128)
    h = bn_relu(h, g2, be2, D2)
    h = jnp.maximum(
        jnp.dot(h, w3_ref[...], preferred_element_type=jnp.float32) + b3, 0.0)

    # Output layer (64 -> 1): VPU multiply + lane reduction; no MXU pass wasted
    # on a 1-wide result.
    out = jnp.sum(h * w4r, axis=-1, keepdims=True) + b4                # (M, 1)
    o_ref[...] = out.reshape(1, m_rows, 1).astype(o_ref.dtype)


def _pack_slab(params):
    """Pack the small per-feature vectors + output-layer params into [8, 256]."""
    slab = jnp.zeros((8, D1), jnp.float32)
    slab = slab.at[0, :].set(params["g1"].reshape(-1))
    slab = slab.at[1, :].set(params["be1"].reshape(-1))
    slab = slab.at[2, :D2].set(params["g2"].reshape(-1))
    slab = slab.at[3, :D2].set(params["be2"].reshape(-1))
    slab = slab.at[4, :D3].set(params["b3"].reshape(-1))
    slab = slab.at[5, :D3].set(params["w4"].reshape(-1))
    slab = slab.at[5, D3].set(params["b4"].reshape(-1)[0])
    return slab


def _choose_tb(nb, b, row_cap=2048):
    """Largest divisor of nb with tb*b <= row_cap; prefer an even grid length
    so v7x's two TensorCores split the grid evenly."""
    cap = max(1, row_cap // max(b, 1))
    divisors = [t for t in range(1, nb + 1) if nb % t == 0 and t <= cap]
    if not divisors:
        return 1
    even_grid = [t for t in divisors if (nb // t) % 2 == 0]
    return max(even_grid) if even_grid else max(divisors)


def mymodel_forward_batched(xs, params, *, tb=None):
    """xs: [NB, B, D] float32 -> [NB, B, 1].

    Each [B, D] slice is one independent MyModel forward pass (BatchNorm uses
    training-mode statistics over that slice's B rows, matching PyTorch).
    TB sub-batches are fused per grid step so the MXU sees M=TB*B rows.
    """
    nb, b, d = xs.shape
    if tb is None:
        tb = _choose_tb(nb, b)
    assert nb % tb == 0, "tb must divide the number of stacked batches"
    g = nb // tb
    m = tb * b
    slab = _pack_slab(params)

    out = pl.pallas_call(
        mlp_kernel,
        out_shape=jax.ShapeDtypeStruct((g, m, 1), jnp.float32),
        grid=(g,),
        in_specs=[
            pl.BlockSpec((tb, b, d), lambda n: (n, 0, 0)),   # per-step batches
            pl.BlockSpec((d, D1), lambda n: (0, 0)),         # w1 (VMEM-resident)
            pl.BlockSpec((D1, D2), lambda n: (0, 0)),        # w2 (VMEM-resident)
            pl.BlockSpec((D2, D3), lambda n: (0, 0)),        # w3 (VMEM-resident)
            pl.BlockSpec((8, D1), lambda n: (0, 0)),         # packed param slab
        ],
        out_specs=pl.BlockSpec((1, m, 1), lambda n: (n, 0, 0)),
        compiler_params=pltpu.CompilerParams(
            dimension_semantics=("parallel",)),
    )(xs, params["w1"], params["w2"], params["w3"], slab)

    return out.reshape(nb, b, 1)


def mymodel_forward(x, params):
    """Single-batch API (matches MyModel.forward): x [B, D] -> [B, 1]."""
    return mymodel_forward_batched(x[None], params)[0]


def init_params(key, input_dim):
    """PyTorch-style init; Linear weights pre-transposed to [in, out]."""
    dims = [(input_dim, D1), (D1, D2), (D2, D3), (D3, 1)]
    ks = jax.random.split(key, 8)
    params = {}
    for i, (fan_in, fan_out) in enumerate(dims, start=1):
        bound = 1.0 / jnp.sqrt(jnp.float32(fan_in))
        params[f"w{i}"] = jax.random.uniform(
            ks[2 * (i - 1)], (fan_in, fan_out), jnp.float32, -bound, bound)
        params[f"b{i}"] = jax.random.uniform(
            ks[2 * (i - 1) + 1], (1, fan_out), jnp.float32, -bound, bound)
    params["g1"] = jnp.ones((1, D1), jnp.float32)
    params["be1"] = jnp.zeros((1, D1), jnp.float32)
    params["g2"] = jnp.ones((1, D2), jnp.float32)
    params["be2"] = jnp.zeros((1, D2), jnp.float32)
    return params


def reference_forward(x, params):
    """Pure-JAX single-batch reference (training-mode BN, full-f32 matmuls)."""
    hp = jax.lax.Precision.HIGHEST
    h = jnp.dot(x, params["w1"], precision=hp) + params["b1"]
    m = h.mean(0, keepdims=True)
    v = ((h - m) ** 2).mean(0, keepdims=True)
    h = jnp.maximum((h - m) / jnp.sqrt(v + BN_EPS) * params["g1"] + params["be1"], 0.0)
    h = jnp.dot(h, params["w2"], precision=hp) + params["b2"]
    m = h.mean(0, keepdims=True)
    v = ((h - m) ** 2).mean(0, keepdims=True)
    h = jnp.maximum((h - m) / jnp.sqrt(v + BN_EPS) * params["g2"] + params["be2"], 0.0)
    h = jnp.maximum(jnp.dot(h, params["w3"], precision=hp) + params["b3"], 0.0)
    return jnp.dot(h, params["w4"], precision=hp) + params["b4"]


if __name__ == "__main__":
    key = jax.random.PRNGKey(0)
    k_x, k_p = jax.random.split(key)

    # Stacked batches, per-batch rows (>1 for BN training stats), input_dim.
    NB, B, D = 8, 8, 32
    xs = jax.random.normal(k_x, (NB, B, D), jnp.float32)
    params = init_params(k_p, D)

    out = jax.block_until_ready(mymodel_forward_batched(xs, params))
    assert out.shape == (NB, B, 1), out.shape

    ref = jax.vmap(lambda xb: reference_forward(xb, params))(xs)
    assert jnp.allclose(out, ref, atol=5e-4, rtol=1e-3), (
        float(jnp.max(jnp.abs(out - ref))))

    # Single-batch path (original MyModel API) also works.
    out1 = jax.block_until_ready(mymodel_forward(xs[0], params))
    assert jnp.allclose(out1, ref[0], atol=5e-4, rtol=1e-3)

    print("KERNEL_OK")
</pallas_src>

<mosaic_0001>
module attributes {stable_mosaic.version = 11 : i64} {
  func.func @mlp_kernel(%arg0: i32, %arg1: memref<4x8x32xf32, #tpu.memory_space<vmem>>, %arg2: memref<32x256xf32, #tpu.memory_space<vmem>>, %arg3: memref<256x128xf32, #tpu.memory_space<vmem>>, %arg4: memref<128x64xf32, #tpu.memory_space<vmem>>, %arg5: memref<8x256xf32, #tpu.memory_space<vmem>>, %arg6: memref<1x32x1xf32, #tpu.memory_space<vmem>>) attributes {dimension_semantics = [#tpu.dimension_semantics<parallel>], iteration_bounds = array<i64: 2>, scalar_prefetch = 0 : i64, scratch_operands = 0 : i64, tpu.core_type = #tpu.core_type<tc>, window_params = [{transform_indices = @transform_0, window_bounds = array<i64: 4, 8, 32>}, {pipeline_mode = #tpu.pipeline_mode<synchronous>, transform_indices = @transform_1, window_bounds = array<i64: 32, 256>}, {pipeline_mode = #tpu.pipeline_mode<synchronous>, transform_indices = @transform_2, window_bounds = array<i64: 256, 128>}, {pipeline_mode = #tpu.pipeline_mode<synchronous>, transform_indices = @transform_3, window_bounds = array<i64: 128, 64>}, {pipeline_mode = #tpu.pipeline_mode<synchronous>, transform_indices = @transform_4, window_bounds = array<i64: 8, 256>}, {transform_indices = @transform_5, window_bounds = array<i64: 1, 32, 1>}]} {
    %c0 = arith.constant 0 : index
    %c0_0 = arith.constant 0 : index
    %c0_1 = arith.constant 0 : index
    %0 = vector.load %arg1[%c0, %c0_0, %c0_1] : memref<4x8x32xf32, #tpu.memory_space<vmem>>, vector<4x8x32xf32>
    %1 = vector.shape_cast %0 : vector<4x8x32xf32> to vector<32x32xf32>
    %c0_2 = arith.constant 0 : index
    %c0_3 = arith.constant 0 : index
    %2 = vector.load %arg5[%c0_2, %c0_3] : memref<8x256xf32, #tpu.memory_space<vmem>>, vector<8x256xf32>
    %3 = vector.extract_strided_slice %2 {offsets = [0, 0], sizes = [1, 256], strides = [1, 1]} : vector<8x256xf32> to vector<1x256xf32>
    %4 = vector.extract_strided_slice %2 {offsets = [1, 0], sizes = [1, 256], strides = [1, 1]} : vector<8x256xf32> to vector<1x256xf32>
    %5 = vector.extract_strided_slice %2 {offsets = [2, 0], sizes = [1, 128], strides = [1, 1]} : vector<8x256xf32> to vector<1x128xf32>
    %6 = vector.extract_strided_slice %2 {offsets = [3, 0], sizes = [1, 128], strides = [1, 1]} : vector<8x256xf32> to vector<1x128xf32>
    %7 = vector.extract_strided_slice %2 {offsets = [4, 0], sizes = [1, 64], strides = [1, 1]} : vector<8x256xf32> to vector<1x64xf32>
    %8 = vector.extract_strided_slice %2 {offsets = [5, 0], sizes = [1, 64], strides = [1, 1]} : vector<8x256xf32> to vector<1x64xf32>
    %9 = vector.extract_strided_slice %2 {offsets = [5, 64], sizes = [1, 1], strides = [1, 1]} : vector<8x256xf32> to vector<1x1xf32>
    %c0_4 = arith.constant 0 : index
    %c0_5 = arith.constant 0 : index
    %10 = vector.load %arg2[%c0_4, %c0_5] : memref<32x256xf32, #tpu.memory_space<vmem>>, vector<32x256xf32>
    %cst = arith.constant dense<0.000000e+00> : vector<32x256xf32>
    %11 = tpu.matmul %1, %10, %cst {dimension_numbers = #tpu.dot_dimension_numbers<[1], [0], [0], [1], [0, 0, 1, 1], [], []>} : vector<32x32xf32>, vector<32x256xf32>, vector<32x256xf32> -> vector<32x256xf32>
    %12 = vector.shape_cast %11 : vector<32x256xf32> to vector<4x8x256xf32>
    %cst_6 = arith.constant dense<0.000000e+00> : vector<4x256xf32>
    %13 = vector.multi_reduction <add>, %12, %cst_6 [1] : vector<4x8x256xf32> to vector<4x256xf32>
    %14 = vector.shape_cast %13 : vector<4x256xf32> to vector<4x1x256xf32>
    %cst_7 = arith.constant 8.000000e+00 : f32
    %15 = vector.broadcast %cst_7 : f32 to vector<4x1x256xf32>
    %16 = arith.divf %14, %15 : vector<4x1x256xf32>
    %17 = vector.broadcast %16 : vector<4x1x256xf32> to vector<4x8x256xf32>
    %18 = arith.subf %12, %17 : vector<4x8x256xf32>
    %19 = arith.mulf %18, %18 : vector<4x8x256xf32>
    %cst_8 = arith.constant dense<0.000000e+00> : vector<4x256xf32>
    %20 = vector.multi_reduction <add>, %19, %cst_8 [1] : vector<4x8x256xf32> to vector<4x256xf32>
    %21 = vector.shape_cast %20 : vector<4x256xf32> to vector<4x1x256xf32>
    %cst_9 = arith.constant 8.000000e+00 : f32
    %22 = vector.broadcast %cst_9 : f32 to vector<4x1x256xf32>
    %23 = arith.divf %21, %22 : vector<4x1x256xf32>
    %cst_10 = arith.constant 9.99999974E-6 : f32
    %24 = vector.broadcast %cst_10 : f32 to vector<4x1x256xf32>
    %25 = arith.addf %23, %24 : vector<4x1x256xf32>
    %26 = math.rsqrt %25 : vector<4x1x256xf32>
    %27 = vector.shape_cast %3 : vector<1x256xf32> to vector<1x1x256xf32>
    %28 = vector.broadcast %27 : vector<1x1x256xf32> to vector<4x1x256xf32>
    %29 = arith.mulf %26, %28 : vector<4x1x256xf32>
    %30 = vector.broadcast %29 : vector<4x1x256xf32> to vector<4x8x256xf32>
    %31 = arith.mulf %18, %30 : vector<4x8x256xf32>
    %32 = vector.shape_cast %4 : vector<1x256xf32> to vector<1x1x256xf32>
    %33 = vector.broadcast %32 : vector<1x1x256xf32> to vector<4x8x256xf32>
    %34 = arith.addf %31, %33 : vector<4x8x256xf32>
    %cst_11 = arith.constant 0.000000e+00 : f32
    %35 = vector.broadcast %cst_11 : f32 to vector<4x8x256xf32>
    %36 = arith.maximumf %34, %35 : vector<4x8x256xf32>
    %37 = vector.shape_cast %36 : vector<4x8x256xf32> to vector<32x256xf32>
    %c0_12 = arith.constant 0 : index
    %c0_13 = arith.constant 0 : index
    %38 = vector.load %arg3[%c0_12, %c0_13] : memref<256x128xf32, #tpu.memory_space<vmem>>, vector<256x128xf32>
    %cst_14 = arith.constant dense<0.000000e+00> : vector<32x128xf32>
    %39 = tpu.matmul %37, %38, %cst_14 {dimension_numbers = #tpu.dot_dimension_numbers<[1], [0], [0], [1], [0, 0, 1, 1], [], []>} : vector<32x256xf32>, vector<256x128xf32>, vector<32x128xf32> -> vector<32x128xf32>
    %40 = vector.shape_cast %39 : vector<32x128xf32> to vector<4x8x128xf32>
    %cst_15 = arith.constant dense<0.000000e+00> : vector<4x128xf32>
    %41 = vector.multi_reduction <add>, %40, %cst_15 [1] : vector<4x8x128xf32> to vector<4x128xf32>
    %42 = vector.shape_cast %41 : vector<4x128xf32> to vector<4x1x128xf32>
    %cst_16 = arith.constant 8.000000e+00 : f32
    %43 = vector.broadcast %cst_16 : f32 to vector<4x1x128xf32>
    %44 = arith.divf %42, %43 : vector<4x1x128xf32>
    %45 = vector.broadcast %44 : vector<4x1x128xf32> to vector<4x8x128xf32>
    %46 = arith.subf %40, %45 : vector<4x8x128xf32>
    %47 = arith.mulf %46, %46 : vector<4x8x128xf32>
    %cst_17 = arith.constant dense<0.000000e+00> : vector<4x128xf32>
    %48 = vector.multi_reduction <add>, %47, %cst_17 [1] : vector<4x8x128xf32> to vector<4x128xf32>
    %49 = vector.shape_cast %48 : vector<4x128xf32> to vector<4x1x128xf32>
    %cst_18 = arith.constant 8.000000e+00 : f32
    %50 = vector.broadcast %cst_18 : f32 to vector<4x1x128xf32>
    %51 = arith.divf %49, %50 : vector<4x1x128xf32>
    %cst_19 = arith.constant 9.99999974E-6 : f32
    %52 = vector.broadcast %cst_19 : f32 to vector<4x1x128xf32>
    %53 = arith.addf %51, %52 : vector<4x1x128xf32>
    %54 = math.rsqrt %53 : vector<4x1x128xf32>
    %55 = vector.shape_cast %5 : vector<1x128xf32> to vector<1x1x128xf32>
    %56 = vector.broadcast %55 : vector<1x1x128xf32> to vector<4x1x128xf32>
    %57 = arith.mulf %54, %56 : vector<4x1x128xf32>
    %58 = vector.broadcast %57 : vector<4x1x128xf32> to vector<4x8x128xf32>
    %59 = arith.mulf %46, %58 : vector<4x8x128xf32>
    %60 = vector.shape_cast %6 : vector<1x128xf32> to vector<1x1x128xf32>
    %61 = vector.broadcast %60 : vector<1x1x128xf32> to vector<4x8x128xf32>
    %62 = arith.addf %59, %61 : vector<4x8x128xf32>
    %cst_20 = arith.constant 0.000000e+00 : f32
    %63 = vector.broadcast %cst_20 : f32 to vector<4x8x128xf32>
    %64 = arith.maximumf %62, %63 : vector<4x8x128xf32>
    %65 = vector.shape_cast %64 : vector<4x8x128xf32> to vector<32x128xf32>
    %c0_21 = arith.constant 0 : index
    %c0_22 = arith.constant 0 : index
    %66 = vector.load %arg4[%c0_21, %c0_22] : memref<128x64xf32, #tpu.memory_space<vmem>>, vector<128x64xf32>
    %cst_23 = arith.constant dense<0.000000e+00> : vector<32x64xf32>
    %67 = tpu.matmul %65, %66, %cst_23 {dimension_numbers = #tpu.dot_dimension_numbers<[1], [0], [0], [1], [0, 0, 1, 1], [], []>} : vector<32x128xf32>, vector<128x64xf32>, vector<32x64xf32> -> vector<32x64xf32>
    %68 = vector.broadcast %7 : vector<1x64xf32> to vector<32x64xf32>
    %69 = arith.addf %67, %68 : vector<32x64xf32>
    %cst_24 = arith.constant 0.000000e+00 : f32
    %70 = vector.broadcast %cst_24 : f32 to vector<32x64xf32>
    %71 = arith.maximumf %69, %70 : vector<32x64xf32>
    %72 = vector.broadcast %8 : vector<1x64xf32> to vector<32x64xf32>
    %73 = arith.mulf %71, %72 : vector<32x64xf32>
    %cst_25 = arith.constant dense<0.000000e+00> : vector<32xf32>
    %74 = vector.multi_reduction <add>, %73, %cst_25 [1] : vector<32x64xf32> to vector<32xf32>
    %75 = vector.shape_cast %74 : vector<32xf32> to vector<32x1xf32>
    %76 = vector.broadcast %9 : vector<1x1xf32> to vector<32x1xf32>
    %77 = arith.addf %75, %76 : vector<32x1xf32>
    %78 = vector.shape_cast %77 : vector<32x1xf32> to vector<1x32x1xf32>
    %c0_26 = arith.constant 0 : index
    %c0_27 = arith.constant 0 : index
    %c0_28 = arith.constant 0 : index
    %79 = vector.load %arg6[%c0_26, %c0_27, %c0_28] : memref<1x32x1xf32, #tpu.memory_space<vmem>>, vector<1x32x1xf32>
    tpu.vector_store %arg6[%c0_26, %c0_27, %c0_28], %78 {strides = array<i32>} : memref<1x32x1xf32, #tpu.memory_space<vmem>>, vector<1x32x1xf32>,
    return
  }
  func.func @transform_0(%arg0: i32) -> (i32, i32, i32) {
    %c0_i32 = arith.constant 0 : i32
    %c0_i32_0 = arith.constant 0 : i32
    %c0_i32_1 = arith.constant 0 : i32
    return %arg0, %c0_i32, %c0_i32_0 : i32, i32, i32
  }
  func.func @transform_1(%arg0: i32) -> (i32, i32) {
    %c0_i32 = arith.constant 0 : i32
    %c0_i32_0 = arith.constant 0 : i32
    %c0_i32_1 = arith.constant 0 : i32
    return %c0_i32, %c0_i32_0 : i32, i32
  }
  func.func @transform_2(%arg0: i32) -> (i32, i32) {
    %c0_i32 = arith.constant 0 : i32
    %c0_i32_0 = arith.constant 0 : i32
    %c0_i32_1 = arith.constant 0 : i32
    return %c0_i32, %c0_i32_0 : i32, i32
  }
  func.func @transform_3(%arg0: i32) -> (i32, i32) {
    %c0_i32 = arith.constant 0 : i32
    %c0_i32_0 = arith.constant 0 : i32
    %c0_i32_1 = arith.constant 0 : i32
    return %c0_i32, %c0_i32_0 : i32, i32
  }
  func.func @transform_4(%arg0: i32) -> (i32, i32) {
    %c0_i32 = arith.constant 0 : i32
    %c0_i32_0 = arith.constant 0 : i32
    %c0_i32_1 = arith.constant 0 : i32
    return %c0_i32, %c0_i32_0 : i32, i32
  }
  func.func @transform_5(%arg0: i32) -> (i32, i32, i32) {
    %c0_i32 = arith.constant 0 : i32
    %c0_i32_0 = arith.constant 0 : i32
    %c0_i32_1 = arith.constant 0 : i32
    return %arg0, %c0_i32, %c0_i32_0 : i32, i32, i32
  }
}

</mosaic_0001>

<llo_original>
// kernel: tpu_custom_call.1
$region0: #{tpu_custom_call.1}
  #allocation0 [shape = 'u32[]', space=smem, size = 0x4, offset = 0x4, fixed_abs, tag = 'smem constant byte address 0x4 - core index']
  #allocation1 [shape = 'u32[144,128]{1,0:T(1,128)}', space=vmem, size = 0x12000, scoped, tag = 'internal scratch']
  %s0 = inlined_call_operand.vmem [shape: f32[8,8,32], index: 0, kind: input, shape index: {}]
  %s1 = inlined_call_operand.vmem [shape: f32[32,256], index: 1, kind: input, shape index: {}]
  %s2 = inlined_call_operand.hbm [shape: f32[256,128], index: 2, kind: input, shape index: {}]
  %s3 = inlined_call_operand.vmem [shape: f32[128,64], index: 3, kind: input, shape index: {}]
  %s4 = inlined_call_operand.vmem [shape: f32[8,256], index: 4, kind: input, shape index: {}]
  %s5 = inlined_call_operand.vmem [shape: f32[2,32,1], index: 5, kind: output, shape index: {}]
  %s6 = sld [smem:[#allocation0]]
  $region57: #{tpu_custom_call.1} parent=0
    _
  %s8 = ssub.s32 1, %s6
  %s9 = scalar_select 0, %s8, %s6
  $region1: #{tpu_custom_call.1} parent=0
    #allocation2 [shape = 'u8[131072]{0}', space=vmem, size = 0x20000, scoped, tag = 'input window, operand 2, single buffered']
    #allocation3 [shape = 's32[2]{0}', space=sflag, size = 0x8, scoped, tag = 'scoped memory for tpu_custom_call.1']
    %10 = vsyncpa [#allocation3], 0
    loop: start=0, step=1, limit=4
    $region2: #{tpu_custom_call.1} parent=1 // loop_pre_header
      _
    $region3: #{tpu_custom_call.1} parent=1 // loop_header
      %s12 = sphi 0, %s16
      %p13 = scmp.ge.s32.totalorder %s12, 4
      %s22 = sphi 0, %s24
      %s25 = sphi 0, %s22
      %s26 = sphi 0, %s25
      %s42 = sphi 0, %s26
      %s46 = sphi 0, %s46
      %s48 = sphi 0, %s46
      %s49 = sphi 0, %s48
      %s63 = sphi 0, %s49
      %s67 = sphi 0, %s67
      %s69 = sphi 0, %s67
      %s70 = sphi 0, %s69
      %s84 = sphi 0, %s70
      %s88 = sphi 0, %s88
      %s90 = sphi 0, %s88
      %s91 = sphi 0, %s90
      %s105 = sphi 0, %s91
      %s109 = sphi 0, %s109
      %s111 = sphi 0, %s109
      %s112 = sphi 0, %s111
      %s126 = sphi 0, %s112
      %s132 = sphi 0, %s134
      %s135 = sphi 0, %s132
      %s136 = sphi 0, %s135
      %s152 = sphi 0, %s136
    $region4: #{tpu_custom_call.1} parent=1 // loop_header_branch
      %15 = sbr.rel (%p13) target = $region8
    $region5: #{tpu_custom_call.1} parent=1 // loop_body
      %s17 = ssub.s32 %s12, 1
      %s18 = ssub.s32 %s12, 2
      %s19 = sadd.s32 %s12, 1
      %s20 = ssub.s32 %s12, %s19
      %p21 = scmp.eq.s32.totalorder %s20, 0
      %s23 = sadd.s32 %s22, 1
      %s24 = scalar_select %p21, %s22, %s23
      %p27 = pneg %p21
      %p28 = scmp.eq.s32.totalorder %s12, 1
      %p29 = por %p27, %p28
      %p30 = scmp.ne.s32.totalorder %s22, %s25
      %p31 = scmp.eq.s32.totalorder %s12, 0
      %p32 = por %p30, %p31
      %p33 = scmp.ne.s32.totalorder %s22, %s25
      %p34 = scmp.eq.s32.totalorder %s17, 1
      %p35 = por %p33, %p34
      %p36 = scmp.ne.s32.totalorder %s25, %s26
      %p37 = scmp.eq.s32.totalorder %s17, 0
      %p38 = por %p36, %p37
      %p39 = scmp.ne.s32.totalorder %s25, %s26
      %p40 = scmp.eq.s32.totalorder %s18, 1
      %p41 = por %p39, %p40
      %p43 = scmp.ne.s32.totalorder %s26, %s42
      %p44 = scmp.eq.s32.totalorder %s18, 0
      %p45 = por %p43, %p44
      %s47 = sadd.s32 %s46, 1
      %p50 = scmp.eq.s32.totalorder %s12, 1
      %p51 = scmp.ne.s32.totalorder %s46, %s48
      %p52 = scmp.eq.s32.totalorder %s12, 0
      %p53 = por %p51, %p52
      %p54 = scmp.ne.s32.totalorder %s46, %s48
      %p55 = scmp.eq.s32.totalorder %s17, 1
      %p56 = por %p54, %p55
      %p57 = scmp.ne.s32.totalorder %s48, %s49
      %p58 = scmp.eq.s32.totalorder %s17, 0
      %p59 = por %p57, %p58
      %p60 = scmp.ne.s32.totalorder %s48, %s49
      %p61 = scmp.eq.s32.totalorder %s18, 1
      %p62 = por %p60, %p61
      %p64 = scmp.ne.s32.totalorder %s49, %s63
      %p65 = scmp.eq.s32.totalorder %s18, 0
      %p66 = por %p64, %p65
      %s68 = sadd.s32 %s67, 1
      %p71 = scmp.eq.s32.totalorder %s12, 1
      %p72 = scmp.ne.s32.totalorder %s67, %s69
      %p73 = scmp.eq.s32.totalorder %s12, 0
      %p74 = por %p72, %p73
      %p75 = scmp.ne.s32.totalorder %s67, %s69
      %p76 = scmp.eq.s32.totalorder %s17, 1
      %p77 = por %p75, %p76
      %p78 = scmp.ne.s32.totalorder %s69, %s70
      %p79 = scmp.eq.s32.totalorder %s17, 0
      %p80 = por %p78, %p79
      %p81 = scmp.ne.s32.totalorder %s69, %s70
      %p82 = scmp.eq.s32.totalorder %s18, 1
      %p83 = por %p81, %p82
      %p85 = scmp.ne.s32.totalorder %s70, %s84
      %p86 = scmp.eq.s32.totalorder %s18, 0
      %p87 = por %p85, %p86
      %s89 = sadd.s32 %s88, 1
      %p92 = scmp.eq.s32.totalorder %s12, 1
      %p93 = scmp.ne.s32.totalorder %s88, %s90
      %p94 = scmp.eq.s32.totalorder %s12, 0
      %p95 = por %p93, %p94
      %p96 = scmp.ne.s32.totalorder %s88, %s90
      %p97 = scmp.eq.s32.totalorder %s17, 1
      %p98 = por %p96, %p97
      %p99 = scmp.ne.s32.totalorder %s90, %s91
      %p100 = scmp.eq.s32.totalorder %s17, 0
      %p101 = por %p99, %p100
      %p102 = scmp.ne.s32.totalorder %s90, %s91
      %p103 = scmp.eq.s32.totalorder %s18, 1
      %p104 = por %p102, %p103
      %p106 = scmp.ne.s32.totalorder %s91, %s105
      %p107 = scmp.eq.s32.totalorder %s18, 0
      %p108 = por %p106, %p107
      %s110 = sadd.s32 %s109, 1
      %p113 = scmp.eq.s32.totalorder %s12, 1
      %p114 = scmp.ne.s32.totalorder %s109, %s111
      %p115 = scmp.eq.s32.totalorder %s12, 0
      %p116 = por %p114, %p115
      %p117 = scmp.ne.s32.totalorder %s109, %s111
      %p118 = scmp.eq.s32.totalorder %s17, 1
      %p119 = por %p117, %p118
      %p120 = scmp.ne.s32.totalorder %s111, %s112
      %p121 = scmp.eq.s32.totalorder %s17, 0
      %p122 = por %p120, %p121
      %p123 = scmp.ne.s32.totalorder %s111, %s112
      %p124 = scmp.eq.s32.totalorder %s18, 1
      %p125 = por %p123, %p124
      %p127 = scmp.ne.s32.totalorder %s112, %s126
      %p128 = scmp.eq.s32.totalorder %s18, 0
      %p129 = por %p127, %p128
      %s130 = ssub.s32 %s12, %s19
      %p131 = scmp.eq.s32.totalorder %s130, 0
      %s133 = sadd.s32 %s132, 1
      %s134 = scalar_select %p131, %s132, %s133
      %p137 = pneg %p131
      %p138 = scmp.eq.s32.totalorder %s12, 1
      %p139 = por %p137, %p138
      %p140 = scmp.ne.s32.totalorder %s132, %s135
      %p141 = scmp.eq.s32.totalorder %s12, 0
      %p142 = por %p140, %p141
      %p143 = scmp.ne.s32.totalorder %s132, %s135
      %p144 = scmp.eq.s32.totalorder %s17, 1
      %p145 = por %p143, %p144
      %p146 = scmp.ne.s32.totalorder %s135, %s136
      %p147 = scmp.eq.s32.totalorder %s17, 0
      %p148 = por %p146, %p147
      %p149 = scmp.ne.s32.totalorder %s135, %s136
      %p150 = scmp.eq.s32.totalorder %s18, 1
      %p151 = por %p149, %p150
      %p153 = scmp.ne.s32.totalorder %s136, %s152
      %p154 = scmp.eq.s32.totalorder %s18, 0
      %p155 = por %p153, %p154
      %p156 = scmp.le.s32.totalorder 1, %s12
      %p157 = scmp.lt.s32.totalorder %s12, 3
      %p158 = pnand %p156, %p157
      %p159 = pneg %p158
      // Predicated region
      $region9: #{tpu_custom_call.1} parent=5 // pred_check
        _
      $region10: #{tpu_custom_call.1} parent=5 // pred_check_branch
        %161 = sbr.rel (%p158) target = $region12
      $region11: #{tpu_custom_call.1} parent=5 // pred_region
        %s162 = ssub.s32 %s12, 1
        // Predicated region
        $region13: #{tpu_custom_call.1} parent=11 // pred_check
          %p163 = pneg %p59
        $region14: #{tpu_custom_call.1} parent=11 // pred_check_branch
          %165 = sbr.rel (%p163) target = $region16
        $region15: #{tpu_custom_call.1} parent=11 // pred_region
          _
        $region16: #{tpu_custom_call.1} parent=11 // pred_fallthru
          _
        // Predicated region
        $region17: #{tpu_custom_call.1} parent=11 // pred_check
          %p166 = pneg %p80
        $region18: #{tpu_custom_call.1} parent=11 // pred_check_branch
          %168 = sbr.rel (%p166) target = $region20
        $region19: #{tpu_custom_call.1} parent=11 // pred_region
          %s170 = ssub.s32 4096, 4096
          %171 = vsyncadd [#allocation3], %s170
          %s172 = sshll.u32 [#allocation2], 4
          %s173 = int_to_ptr.vmem [resolvable:$true] %s172
          %178 = dma.hbm_to_vmem [thread:$0]  %s2, 4096, %s173, [#allocation3], 128, 128, 8
        $region20: #{tpu_custom_call.1} parent=11 // pred_fallthru
          _
        // Predicated region
        $region21: #{tpu_custom_call.1} parent=11 // pred_check
          %p179 = pneg %p101
        $region22: #{tpu_custom_call.1} parent=11 // pred_check_branch
          %181 = sbr.rel (%p179) target = $region24
        $region23: #{tpu_custom_call.1} parent=11 // pred_region
          _
        $region24: #{tpu_custom_call.1} parent=11 // pred_fallthru
          _
        // Predicated region
        $region25: #{tpu_custom_call.1} parent=11 // pred_check
          %p182 = pneg %p122
        $region26: #{tpu_custom_call.1} parent=11 // pred_check_branch
          %184 = sbr.rel (%p182) target = $region28
        $region27: #{tpu_custom_call.1} parent=11 // pred_region
          _
        $region28: #{tpu_custom_call.1} parent=11 // pred_fallthru
          _
      $region12: #{tpu_custom_call.1} parent=5 // pred_fallthru
        _
      %p185 = scmp.lt.s32.totalorder %s12, 2
      // Predicated region
      $region29: #{tpu_custom_call.1} parent=5 // pred_check
        %p186 = pneg %p185
      $region30: #{tpu_custom_call.1} parent=5 // pred_check_branch
        %188 = sbr.rel (%p186) target = $region32
      $region31: #{tpu_custom_call.1} parent=5 // pred_region
        // Predicated region
        $region33: #{tpu_custom_call.1} parent=31 // pred_check
          %p189 = pneg %p32
        $region34: #{tpu_custom_call.1} parent=31 // pred_check_branch
          %191 = sbr.rel (%p189) target = $region36
        $region35: #{tpu_custom_call.1} parent=31 // pred_region
          %s192 = smul.u32 4, %s12
          %p193 = scmp.lt.s32.totalorder %s192, 7
          %s194 = scalar_select %p193, %s192, 7
          %s195 = smul.addr %s194, 8
          %s196 = scalar_lea.vmem %s0, %s195
          %s197 = smul.u32 4, %s12
        $region36: #{tpu_custom_call.1} parent=31 // pred_fallthru
          _
      $region32: #{tpu_custom_call.1} parent=5 // pred_fallthru
        _
      %p198 = scmp.le.s32.totalorder 1, %s12
      %p199 = scmp.lt.s32.totalorder %s12, 3
      %p200 = pnand %p198, %p199
      %p201 = pneg %p200
      // Predicated region
      $region37: #{tpu_custom_call.1} parent=5 // pred_check
        _
      $region38: #{tpu_custom_call.1} parent=5 // pred_check_branch
        %203 = sbr.rel (%p200) target = $region40
      $region39: #{tpu_custom_call.1} parent=5 // pred_region
        %s204 = ssub.s32 %s12, 1
        // Predicated region
        $region41: #{tpu_custom_call.1} parent=39 // pred_check
          %p205 = pneg %p80
        $region42: #{tpu_custom_call.1} parent=39 // pred_check_branch
          %207 = sbr.rel (%p205) target = $region44
        $region43: #{tpu_custom_call.1} parent=39 // pred_region
          %208 = dma.done [#allocation3], 4096
        $region44: #{tpu_custom_call.1} parent=39 // pred_fallthru
          _
        %s209 = smul.u32 4, %s17
        %p210 = scmp.lt.s32.totalorder %s209, 7
        %s211 = scalar_select %p210, %s209, 7
        %s212 = smul.addr %s211, 8
        %s213 = scalar_lea.vmem %s0, %s212
        %p214 = pneg %p38
        %p215 = pneg %p35
        %p216 = pneg %p59
        %p217 = pneg %p56
        %p218 = pneg %p80
        %p219 = pneg %p77
        %p220 = pneg %p101
        %p221 = pneg %p98
        %p222 = pneg %p122
        %p223 = pneg %p119
        %p224 = pneg %p148
        %p225 = pneg %p145
        %p226 = scmp.lt.s32.totalorder %s17, 1
        %s227 = scalar_select %p226, %s17, 1
        %s228 = smul.addr %s227, 4
        %s229 = smul.addr %s228, 8
        %s230 = scalar_lea.vmem %s5, %s229
        %s231 = smul.u32 4, %s17
        %p232 = scmp.lt.s32.totalorder %s231, 7
        %s233 = scalar_select %p232, %s231, 7
        %s234 = smul.addr %s233, 8
        %s235 = scalar_lea.vmem %s0, %s234
        %s236 = smul.u32 4, %s17
        %p237 = scmp.lt.s32.totalorder %s17, 1
        %s238 = scalar_select %p237, %s17, 1
        %s239 = smul.addr %s238, 4
        %s240 = smul.addr %s239, 8
        %s241 = scalar_lea.vmem %s5, %s240
        %v242 = vld [vmem:[%s235] sm:$0xff]
        %v243 = vld [vmem:[%s235 + $0x8] sm:$0xff]
        %v244 = vld [vmem:[%s235 + $0x10] sm:$0xff]
        %v245 = vld [vmem:[%s235 + $0x18] sm:$0xff]
        %v246 = vld [vmem:[%s4] sm:$0xff]
        %v247 = vld [vmem:[%s4 + $0x8] sm:$0xff]
        %v248 = vld [vmem:[%s1] sm:$0xff]
        %v249 = vld [vmem:[%s1 + $0x8] sm:$0xff]
        %v250 = vld [vmem:[%s1 + $0x10] sm:$0xff]
        %v251 = vld [vmem:[%s1 + $0x18] sm:$0xff]
        %v252 = vld [vmem:[%s1 + $0x20] sm:$0xff]
        %v253 = vld [vmem:[%s1 + $0x28] sm:$0xff]
        %v254 = vld [vmem:[%s1 + $0x30] sm:$0xff]
        %v255 = vld [vmem:[%s1 + $0x38] sm:$0xff]
        %vm256 = vcmask 261120
        %v258 = vsel %vm256, %v242, 0
        %v261 = vsel %vm256, %v243, 0
        %v264 = vsel %vm256, %v244, 0
        %v267 = vsel %vm256, %v245, 0
        %269 = vmatprep.subr.mxu0 %v249
        %270 = vmatpush1.msra.mxu0 %v248
        %271 = vmatprep.subr.mxu0 %v251
        %272 = vmatpush1.msra.mxu0 %v250
        %273 = vmatprep.subr.mxu0 %v253
        %274 = vmatpush1.msra.mxu0 %v252
        %275 = vmatprep.subr.mxu0 %v255
        %276 = vmatpush1.msra.mxu0 %v254
        %277 = vmatprep.subr.mxu0 0.0
        %278 = vmatpush1.msra.mxu0 0.0
        %279 = vmatprep.subr.mxu0 0.0
        %280 = vmatpush1.msra.mxu0 0.0
        %281 = vmatprep.subr.mxu0 0.0
        %282 = vmatpush1.msra.mxu0 0.0
        %283 = vmatprep.subr.mxu0 0.0
        %284 = vmatpush1.msra.mxu0 0.0
        %285 = vmatprep.subr.mxu0 0.0
        %286 = vmatpush1.msra.mxu0 0.0
        %287 = vmatprep.subr.mxu0 0.0
        %288 = vmatpush1.msra.mxu0 0.0
        %289 = vmatprep.subr.mxu0 0.0
        %290 = vmatpush1.msra.mxu0 0.0
        %291 = vmatprep.subr.mxu0 0.0
        %292 = vmatpush1.msra.mxu0 0.0
        %293 = vmatprep.subr.mxu0 0.0
        %294 = vmatpush1.msra.mxu0 0.0
        %295 = vmatprep.subr.mxu0 0.0
        %296 = vmatpush1.msra.mxu0 0.0
        %297 = vmatprep.subr.mxu0 0.0
        %298 = vmatpush1.msra.mxu0 0.0
        %299 = vmatprep.subr.mxu0 0.0
        %300 = vmatpush1.msra.mxu0 0.0
        %301 = vmatprep.subr.mxu0 0.0
        %302 = vmatpush1.msra.mxu0 0.0
        %303 = vmatprep.subr.mxu0 0.0
        %304 = vmatpush1.msra.mxu0 0.0
        %305 = vmatprep.subr.mxu0 0.0
        %306 = vmatpush1.msra.mxu0 0.0
        %307 = vmatprep.subr.mxu0 0.0
        %308 = vmatpush1.msra.mxu0 0.0
        %309 = vmatprep.subr.mxu0 0.0
        %310 = vmatpush1.msra.mxu0 0.0
        %311 = vmatprep.subr.mxu0 0.0
        %312 = vmatpush1.msra.mxu0 0.0
        %313 = vmatprep.subr.mxu0 0.0
        %314 = vmatpush1.msra.mxu0 0.0
        %315 = vmatprep.subr.mxu0 0.0
        %316 = vmatpush1.msra.mxu0 0.0
        %317 = vmatprep.subr.mxu0 0.0
        %318 = vmatpush1.msra.mxu0 0.0
        %319 = vmatprep.subr.mxu0 0.0
        %320 = vmatpush1.msra.mxu0 0.0
        %321 = vmatprep.subr.mxu0 0.0
        %322 = vmatpush1.msra.mxu0 0.0
        %323 = vmatprep.subr.mxu0 0.0
        %324 = vmatpush1.msra.mxu0 0.0
        %325 = vmatprep.subr.mxu0 0.0
        %326 = vmatpush1.msra.mxu0 0.0
        %327 = vmatprep.subr.mxu0 0.0
        %328 = vmatpush1.msra.mxu0 0.0
        %329 = vmatprep.subr.mxu0 0.0
        %330 = vmatpush1.msra.mxu0 0.0
        %331 = vmatprep.subr.mxu0 0.0
        %332 = vmatpush1.msra.mxu0 0.0
        %333 = vmatprep.mubr.f32.mxu0 0.0
        %334 = vmatmul.mubr.f32.gmra.mrb[0].mxu0 %v258
        %v335 = vpop.f32.mrb[0].mxu0
        %v336 = vadd.f32 0.0, %v335
        %v337 = vpop.f32.mrb[0].mxu0
        %v338 = vadd.f32 0.0, %v337
        %339 = vmatprep.mubr.f32.mxu0 0.0
        %340 = vmatmul.mubr.f32.gmra.mrb[0].mxu0 %v261
        %v341 = vpop.f32.mrb[0].mxu0
        %v342 = vadd.f32 0.0, %v341
        %v343 = vpop.f32.mrb[0].mxu0
        %v344 = vadd.f32 0.0, %v343
        %345 = vmatprep.mubr.f32.mxu0 0.0
        %346 = vmatmul.mubr.f32.gmra.mrb[0].mxu0 %v264
        %v347 = vpop.f32.mrb[0].mxu0
        %v348 = vadd.f32 0.0, %v347
        %v349 = vpop.f32.mrb[0].mxu0
        %v350 = vadd.f32 0.0, %v349
        %351 = vmatprep.mubr.f32.mxu0 0.0
        %352 = vmatmul.mubr.f32.gmra.mrb[0].mxu0 %v267
        %v353 = vpop.f32.mrb[0].mxu0
        %v354 = vadd.f32 0.0, %v353
        %v355 = vpop.f32.mrb[0].mxu0
        %v356 = vadd.f32 0.0, %v355
        %357 = vdwg.mxu0
        %v358 = vrot.slane %v336, 4
        %v359 = vadd.f32 %v336, %v358
        %v360 = vrot.slane %v359, 2
        %v361 = vadd.f32 %v359, %v360
        %v362 = vrot.slane %v361, 1
        %v363 = vadd.f32 %v361, %v362
        %v364 = vrot.slane %v338, 4
        %v365 = vadd.f32 %v338, %v364
        %v366 = vrot.slane %v365, 2
        %v367 = vadd.f32 %v365, %v366
        %v368 = vrot.slane %v367, 1
        %v369 = vadd.f32 %v367, %v368
        %v370 = vrot.slane %v342, 4
        %v371 = vadd.f32 %v342, %v370
        %v372 = vrot.slane %v371, 2
        %v373 = vadd.f32 %v371, %v372
        %v374 = vrot.slane %v373, 1
        %v375 = vadd.f32 %v373, %v374
        %v376 = vrot.slane %v344, 4
        %v377 = vadd.f32 %v344, %v376
        %v378 = vrot.slane %v377, 2
        %v379 = vadd.f32 %v377, %v378
        %v380 = vrot.slane %v379, 1
        %v381 = vadd.f32 %v379, %v380
        %v382 = vrot.slane %v348, 4
        %v383 = vadd.f32 %v348, %v382
        %v384 = vrot.slane %v383, 2
        %v385 = vadd.f32 %v383, %v384
        %v386 = vrot.slane %v385, 1
        %v387 = vadd.f32 %v385, %v386
        %v388 = vrot.slane %v350, 4
        %v389 = vadd.f32 %v350, %v388
        %v390 = vrot.slane %v389, 2
        %v391 = vadd.f32 %v389, %v390
        %v392 = vrot.slane %v391, 1
        %v393 = vadd.f32 %v391, %v392
        %v394 = vrot.slane %v354, 4
        %v395 = vadd.f32 %v354, %v394
        %v396 = vrot.slane %v395, 2
        %v397 = vadd.f32 %v395, %v396
        %v398 = vrot.slane %v397, 1
        %v399 = vadd.f32 %v397, %v398
        %v400 = vrot.slane %v356, 4
        %v401 = vadd.f32 %v356, %v400
        %v402 = vrot.slane %v401, 2
        %v403 = vadd.f32 %v401, %v402
        %v404 = vrot.slane %v403, 1
        %v405 = vadd.f32 %v403, %v404
        %v406 = vrcp.pop 8.0
        %v407 = vmul.f32 %v363, %v406
        %v408 = vmul.f32 %v369, %v406
        %v409 = vmul.f32 %v375, %v406
        %v410 = vmul.f32 %v381, %v406
        %v411 = vmul.f32 %v387, %v406
        %v412 = vmul.f32 %v393, %v406
        %v413 = vmul.f32 %v399, %v406
        %v414 = vmul.f32 %v405, %v406
        %v415 = vsub.f32 %v336, %v407
        %v416 = vsub.f32 %v338, %v408
        %v417 = vsub.f32 %v342, %v409
        %v418 = vsub.f32 %v344, %v410
        %v419 = vsub.f32 %v348, %v411
        %v420 = vsub.f32 %v350, %v412
        %v421 = vsub.f32 %v354, %v413
        %v422 = vsub.f32 %v356, %v414
        %v423 = vmul.f32 %v415, %v415
        %v424 = vmul.f32 %v416, %v416
        %v425 = vmul.f32 %v417, %v417
        %v426 = vmul.f32 %v418, %v418
        %v427 = vmul.f32 %v419, %v419
        %v428 = vmul.f32 %v420, %v420
        %v429 = vmul.f32 %v421, %v421
        %v430 = vmul.f32 %v422, %v422
        %v431 = vrot.slane %v423, 4
        %v432 = vadd.f32 %v423, %v431
        %v433 = vrot.slane %v432, 2
        %v434 = vadd.f32 %v432, %v433
        %v435 = vrot.slane %v434, 1
        %v436 = vadd.f32 %v434, %v435
        %v437 = vrot.slane %v424, 4
        %v438 = vadd.f32 %v424, %v437
        %v439 = vrot.slane %v438, 2
        %v440 = vadd.f32 %v438, %v439
        %v441 = vrot.slane %v440, 1
        %v442 = vadd.f32 %v440, %v441
        %v443 = vrot.slane %v425, 4
        %v444 = vadd.f32 %v425, %v443
        %v445 = vrot.slane %v444, 2
        %v446 = vadd.f32 %v444, %v445
        %v447 = vrot.slane %v446, 1
        %v448 = vadd.f32 %v446, %v447
        %v449 = vrot.slane %v426, 4
        %v450 = vadd.f32 %v426, %v449
        %v451 = vrot.slane %v450, 2
        %v452 = vadd.f32 %v450, %v451
        %v453 = vrot.slane %v452, 1
        %v454 = vadd.f32 %v452, %v453
        %v455 = vrot.slane %v427, 4
        %v456 = vadd.f32 %v427, %v455
        %v457 = vrot.slane %v456, 2
        %v458 = vadd.f32 %v456, %v457
        %v459 = vrot.slane %v458, 1
        %v460 = vadd.f32 %v458, %v459
        %v461 = vrot.slane %v428, 4
        %v462 = vadd.f32 %v428, %v461
        %v463 = vrot.slane %v462, 2
        %v464 = vadd.f32 %v462, %v463
        %v465 = vrot.slane %v464, 1
        %v466 = vadd.f32 %v464, %v465
        %v467 = vrot.slane %v429, 4
        %v468 = vadd.f32 %v429, %v467
        %v469 = vrot.slane %v468, 2
        %v470 = vadd.f32 %v468, %v469
        %v471 = vrot.slane %v470, 1
        %v472 = vadd.f32 %v470, %v471
        %v473 = vrot.slane %v430, 4
        %v474 = vadd.f32 %v430, %v473
        %v475 = vrot.slane %v474, 2
        %v476 = vadd.f32 %v474, %v475
        %v477 = vrot.slane %v476, 1
        %v478 = vadd.f32 %v476, %v477
        %v479 = vmul.f32 %v436, %v406
        %v480 = vmul.f32 %v442, %v406
        %v481 = vmul.f32 %v448, %v406
        %v482 = vmul.f32 %v454, %v406
        %v483 = vmul.f32 %v460, %v406
        %v484 = vmul.f32 %v466, %v406
        %v485 = vmul.f32 %v472, %v406
        %v486 = vmul.f32 %v478, %v406
        %v487 = vadd.f32 %v479, 1e-05
        %v488 = vadd.f32 %v480, 1e-05
        %v489 = vadd.f32 %v481, 1e-05
        %v490 = vadd.f32 %v482, 1e-05
        %v491 = vadd.f32 %v483, 1e-05
        %v492 = vadd.f32 %v484, 1e-05
        %v493 = vadd.f32 %v485, 1e-05
        %v494 = vadd.f32 %v486, 1e-05
        %v495 = vrsqrt.pop %v487
        %v496 = vrsqrt.pop %v488
        %v497 = vrsqrt.pop %v489
        %v498 = vrsqrt.pop %v490
        %v499 = vrsqrt.pop %v491
        %v500 = vrsqrt.pop %v492
        %v501 = vrsqrt.pop %v493
        %v502 = vrsqrt.pop %v494
        %v503 = vmul.f32 %v495, %v246
        %v504 = vmul.f32 %v496, %v247
        %v505 = vmul.f32 %v497, %v246
        %v506 = vmul.f32 %v498, %v247
        %v507 = vmul.f32 %v499, %v246
        %v508 = vmul.f32 %v500, %v247
        %v509 = vmul.f32 %v501, %v246
        %v510 = vmul.f32 %v502, %v247
        %v511 = vlaneseq
        %v512 = vshrl.u32 %v511, 7
        %v513 = vsub.s32 0, %v512
        %v514 = vrot.slane %v503, %v513
        %v515 = vlaneseq
        %v516 = vshrl.u32 %v515, 7
        %v517 = vsub.s32 0, %v516
        %v518 = vrot.slane %v504, %v517
        %v519 = vlaneseq
        %v520 = vshrl.u32 %v519, 7
        %v521 = vsub.s32 0, %v520
        %v522 = vrot.slane %v505, %v521
        %v523 = vlaneseq
        %v524 = vshrl.u32 %v523, 7
        %v525 = vsub.s32 0, %v524
        %v526 = vrot.slane %v506, %v525
        %v527 = vlaneseq
        %v528 = vshrl.u32 %v527, 7
        %v529 = vsub.s32 0, %v528
        %v530 = vrot.slane %v507, %v529
        %v531 = vlaneseq
        %v532 = vshrl.u32 %v531, 7
        %v533 = vsub.s32 0, %v532
        %v534 = vrot.slane %v508, %v533
        %v535 = vlaneseq
        %v536 = vshrl.u32 %v535, 7
        %v537 = vsub.s32 0, %v536
        %v538 = vrot.slane %v509, %v537
        %v539 = vlaneseq
        %v540 = vshrl.u32 %v539, 7
        %v541 = vsub.s32 0, %v540
        %v542 = vrot.slane %v510, %v541
        %v543 = vmul.f32 %v415, %v514
        %v544 = vmul.f32 %v416, %v518
        %v545 = vmul.f32 %v417, %v522
        %v546 = vmul.f32 %v418, %v526
        %v547 = vmul.f32 %v419, %v530
        %v548 = vmul.f32 %v420, %v534
        %v549 = vmul.f32 %v421, %v538
        %v550 = vmul.f32 %v422, %v542
        %v551 = vlaneseq
        %v552 = vshrl.u32 %v551, 7
        %v553 = vsub.s32 1, %v552
        %v554 = vrot.slane %v246, %v553
        %v555 = vlaneseq
        %v556 = vshrl.u32 %v555, 7
        %v557 = vsub.s32 1, %v556
        %v558 = vrot.slane %v247, %v557
        %v559 = vadd.f32 %v543, %v554
        %v560 = vadd.f32 %v544, %v558
        %v561 = vadd.f32 %v545, %v554
        %v562 = vadd.f32 %v546, %v558
        %v563 = vadd.f32 %v547, %v554
        %v564 = vadd.f32 %v548, %v558
        %v565 = vadd.f32 %v549, %v554
        %v566 = vadd.f32 %v550, %v558
        %v567 = vmax.f32 %v559, 0.0
        %v568 = vmax.f32 %v560, 0.0
        %v569 = vmax.f32 %v561, 0.0
        %v570 = vmax.f32 %v562, 0.0
        %v571 = vmax.f32 %v563, 0.0
        %v572 = vmax.f32 %v564, 0.0
        %v573 = vmax.f32 %v565, 0.0
        %v574 = vmax.f32 %v566, 0.0
        %v575 = vld [vmem:[#allocation2] sm:$0xff]
        %v576 = vld [vmem:[#allocation2 + $0x8] sm:$0xff]
        %v577 = vld [vmem:[#allocation2 + $0x10] sm:$0xff]
        %v578 = vld [vmem:[#allocation2 + $0x18] sm:$0xff]
        %v579 = vld [vmem:[#allocation2 + $0x20] sm:$0xff]
        %v580 = vld [vmem:[#allocation2 + $0x28] sm:$0xff]
        %v581 = vld [vmem:[#allocation2 + $0x30] sm:$0xff]
        %v582 = vld [vmem:[#allocation2 + $0x38] sm:$0xff]
        %v583 = vld [vmem:[#allocation2 + $0x40] sm:$0xff]
        %v584 = vld [vmem:[#allocation2 + $0x48] sm:$0xff]
        %v585 = vld [vmem:[#allocation2 + $0x50] sm:$0xff]
        %v586 = vld [vmem:[#allocation2 + $0x58] sm:$0xff]
        %v587 = vld [vmem:[#allocation2 + $0x60] sm:$0xff]
        %v588 = vld [vmem:[#allocation2 + $0x68] sm:$0xff]
        %v589 = vld [vmem:[#allocation2 + $0x70] sm:$0xff]
        %v590 = vld [vmem:[#allocation2 + $0x78] sm:$0xff]
        %v591 = vld [vmem:[#allocation2 + $0x80] sm:$0xff]
        %v592 = vld [vmem:[#allocation2 + $0x88] sm:$0xff]
        %v593 = vld [vmem:[#allocation2 + $0x90] sm:$0xff]
        %v594 = vld [vmem:[#allocation2 + $0x98] sm:$0xff]
        %v595 = vld [vmem:[#allocation2 + $0xa0] sm:$0xff]
        %v596 = vld [vmem:[#allocation2 + $0xa8] sm:$0xff]
        %v597 = vld [vmem:[#allocation2 + $0xb0] sm:$0xff]
        %v598 = vld [vmem:[#allocation2 + $0xb8] sm:$0xff]
        %v599 = vld [vmem:[#allocation2 + $0xc0] sm:$0xff]
        %v600 = vld [vmem:[#allocation2 + $0xc8] sm:$0xff]
        %v601 = vld [vmem:[#allocation2 + $0xd0] sm:$0xff]
        %v602 = vld [vmem:[#allocation2 + $0xd8] sm:$0xff]
        %v603 = vld [vmem:[#allocation2 + $0xe0] sm:$0xff]
        %v604 = vld [vmem:[#allocation2 + $0xe8] sm:$0xff]
        %v605 = vld [vmem:[#allocation2 + $0xf0] sm:$0xff]
        %v606 = vld [vmem:[#allocation2 + $0xf8] sm:$0xff]
        %607 = vmatprep.subr.mxu0 0.0
        %608 = vmatpush1.msra.mxu0 %v575
        %609 = vmatprep.subr.mxu0 0.0
        %610 = vmatpush1.msra.mxu0 %v576
        %611 = vmatprep.subr.mxu0 0.0
        %612 = vmatpush1.msra.mxu0 %v577
        %613 = vmatprep.subr.mxu0 0.0
        %614 = vmatpush1.msra.mxu0 %v578
        %615 = vmatprep.subr.mxu0 0.0
        %616 = vmatpush1.msra.mxu0 %v579
        %617 = vmatprep.subr.mxu0 0.0
        %618 = vmatpush1.msra.mxu0 %v580
        %619 = vmatprep.subr.mxu0 0.0
        %620 = vmatpush1.msra.mxu0 %v581
        %621 = vmatprep.subr.mxu0 0.0
        %622 = vmatpush1.msra.mxu0 %v582
        %623 = vmatprep.subr.mxu0 0.0
        %624 = vmatpush1.msra.mxu0 %v583
        %625 = vmatprep.subr.mxu0 0.0
        %626 = vmatpush1.msra.mxu0 %v584
        %627 = vmatprep.subr.mxu0 0.0
        %628 = vmatpush1.msra.mxu0 %v585
        %629 = vmatprep.subr.mxu0 0.0
        %630 = vmatpush1.msra.mxu0 %v586
        %631 = vmatprep.subr.mxu0 0.0
        %632 = vmatpush1.msra.mxu0 %v587
        %633 = vmatprep.subr.mxu0 0.0
        %634 = vmatpush1.msra.mxu0 %v588
        %635 = vmatprep.subr.mxu0 0.0
        %636 = vmatpush1.msra.mxu0 %v589
        %637 = vmatprep.subr.mxu0 0.0
        %638 = vmatpush1.msra.mxu0 %v590
        %639 = vmatprep.subr.mxu0 0.0
        %640 = vmatpush1.msra.mxu0 %v591
        %641 = vmatprep.subr.mxu0 0.0
        %642 = vmatpush1.msra.mxu0 %v592
        %643 = vmatprep.subr.mxu0 0.0
        %644 = vmatpush1.msra.mxu0 %v593
        %645 = vmatprep.subr.mxu0 0.0
        %646 = vmatpush1.msra.mxu0 %v594
        %647 = vmatprep.subr.mxu0 0.0
        %648 = vmatpush1.msra.mxu0 %v595
        %649 = vmatprep.subr.mxu0 0.0
        %650 = vmatpush1.msra.mxu0 %v596
        %651 = vmatprep.subr.mxu0 0.0
        %652 = vmatpush1.msra.mxu0 %v597
        %653 = vmatprep.subr.mxu0 0.0
        %654 = vmatpush1.msra.mxu0 %v598
        %655 = vmatprep.subr.mxu0 0.0
        %656 = vmatpush1.msra.mxu0 %v599
        %657 = vmatprep.subr.mxu0 0.0
        %658 = vmatpush1.msra.mxu0 %v600
        %659 = vmatprep.subr.mxu0 0.0
        %660 = vmatpush1.msra.mxu0 %v601
        %661 = vmatprep.subr.mxu0 0.0
        %662 = vmatpush1.msra.mxu0 %v602
        %663 = vmatprep.subr.mxu0 0.0
        %664 = vmatpush1.msra.mxu0 %v603
        %665 = vmatprep.subr.mxu0 0.0
        %666 = vmatpush1.msra.mxu0 %v604
        %667 = vmatprep.subr.mxu0 0.0
        %668 = vmatpush1.msra.mxu0 %v605
        %669 = vmatprep.subr.mxu0 0.0
        %670 = vmatpush1.msra.mxu0 %v606
        %671 = vmatprep.mubr.f32.mxu0 %v568
        %672 = vmatmul.mubr.f32.gmra.mrb[0].mxu0 %v567
        %v673 = vpop.f32.mrb[0].mxu0
        %v674 = vadd.f32 0.0, %v673
        %v675 = vpop.f32.mrb[0].mxu0
        %676 = vmatprep.mubr.f32.mxu0 %v570
        %677 = vmatmul.mubr.f32.gmra.mrb[0].mxu0 %v569
        %v678 = vpop.f32.mrb[0].mxu0
        %v679 = vadd.f32 0.0, %v678
        %v680 = vpop.f32.mrb[0].mxu0
        %681 = vmatprep.mubr.f32.mxu0 %v572
        %682 = vmatmul.mubr.f32.gmra.mrb[0].mxu0 %v571
        %v683 = vpop.f32.mrb[0].mxu0
        %v684 = vadd.f32 0.0, %v683
        %v685 = vpop.f32.mrb[0].mxu0
        %686 = vmatprep.mubr.f32.mxu0 %v574
        %687 = vmatmul.mubr.f32.gmra.mrb[0].mxu0 %v573
        %v688 = vpop.f32.mrb[0].mxu0
        %v689 = vadd.f32 0.0, %v688
        %v690 = vpop.f32.mrb[0].mxu0
        %691 = vdwg.mxu0
        %v692 = vrot.slane %v674, 4
        %v693 = vadd.f32 %v674, %v692
        %v694 = vrot.slane %v693, 2
        %v695 = vadd.f32 %v693, %v694
        %v696 = vrot.slane %v695, 1
        %v697 = vadd.f32 %v695, %v696
        %v698 = vrot.slane %v679, 4
        %v699 = vadd.f32 %v679, %v698
        %v700 = vrot.slane %v699, 2
        %v701 = vadd.f32 %v699, %v700
        %v702 = vrot.slane %v701, 1
        %v703 = vadd.f32 %v701, %v702
        %v704 = vrot.slane %v684, 4
        %v705 = vadd.f32 %v684, %v704
        %v706 = vrot.slane %v705, 2
        %v707 = vadd.f32 %v705, %v706
        %v708 = vrot.slane %v707, 1
        %v709 = vadd.f32 %v707, %v708
        %v710 = vrot.slane %v689, 4
        %v711 = vadd.f32 %v689, %v710
        %v712 = vrot.slane %v711, 2
        %v713 = vadd.f32 %v711, %v712
        %v714 = vrot.slane %v713, 1
        %v715 = vadd.f32 %v713, %v714
        %v716 = vmul.f32 %v697, %v406
        %v717 = vmul.f32 %v703, %v406
        %v718 = vmul.f32 %v709, %v406
        %v719 = vmul.f32 %v715, %v406
        %v720 = vsub.f32 %v674, %v716
        %v721 = vsub.f32 %v679, %v717
        %v722 = vsub.f32 %v684, %v718
        %v723 = vsub.f32 %v689, %v719
        %v724 = vmul.f32 %v720, %v720
        %v725 = vmul.f32 %v721, %v721
        %v726 = vmul.f32 %v722, %v722
        %v727 = vmul.f32 %v723, %v723
        %v728 = vrot.slane %v724, 4
        %v729 = vadd.f32 %v724, %v728
        %v730 = vrot.slane %v729, 2
        %v731 = vadd.f32 %v729, %v730
        %v732 = vrot.slane %v731, 1
        %v733 = vadd.f32 %v731, %v732
        %v734 = vrot.slane %v725, 4
        %v735 = vadd.f32 %v725, %v734
        %v736 = vrot.slane %v735, 2
        %v737 = vadd.f32 %v735, %v736
        %v738 = vrot.slane %v737, 1
        %v739 = vadd.f32 %v737, %v738
        %v740 = vrot.slane %v726, 4
        %v741 = vadd.f32 %v726, %v740
        %v742 = vrot.slane %v741, 2
        %v743 = vadd.f32 %v741, %v742
        %v744 = vrot.slane %v743, 1
        %v745 = vadd.f32 %v743, %v744
        %v746 = vrot.slane %v727, 4
        %v747 = vadd.f32 %v727, %v746
        %v748 = vrot.slane %v747, 2
        %v749 = vadd.f32 %v747, %v748
        %v750 = vrot.slane %v749, 1
        %v751 = vadd.f32 %v749, %v750
        %v752 = vmul.f32 %v733, %v406
        %v753 = vmul.f32 %v739, %v406
        %v754 = vmul.f32 %v745, %v406
        %v755 = vmul.f32 %v751, %v406
        %v756 = vadd.f32 %v752, 1e-05
        %v757 = vadd.f32 %v753, 1e-05
        %v758 = vadd.f32 %v754, 1e-05
        %v759 = vadd.f32 %v755, 1e-05
        %v760 = vrsqrt.pop %v756
        %v761 = vrsqrt.pop %v757
        %v762 = vrsqrt.pop %v758
        %v763 = vrsqrt.pop %v759
        %v764 = vmul.f32 %v760, %v246
        %v765 = vmul.f32 %v761, %v246
        %v766 = vmul.f32 %v762, %v246
        %v767 = vmul.f32 %v763, %v246
        %v768 = vlaneseq
        %v769 = vshrl.u32 %v768, 7
        %v770 = vsub.s32 2, %v769
        %v771 = vrot.slane %v764, %v770
        %v772 = vlaneseq
        %v773 = vshrl.u32 %v772, 7
        %v774 = vsub.s32 2, %v773
        %v775 = vrot.slane %v765, %v774
        %v776 = vlaneseq
        %v777 = vshrl.u32 %v776, 7
        %v778 = vsub.s32 2, %v777
        %v779 = vrot.slane %v766, %v778
        %v780 = vlaneseq
        %v781 = vshrl.u32 %v780, 7
        %v782 = vsub.s32 2, %v781
        %v783 = vrot.slane %v767, %v782
        %v784 = vmul.f32 %v720, %v771
        %v785 = vmul.f32 %v721, %v775
        %v786 = vmul.f32 %v722, %v779
        %v787 = vmul.f32 %v723, %v783
        %v788 = vlaneseq
        %v789 = vshrl.u32 %v788, 7
        %v790 = vsub.s32 3, %v789
        %v791 = vrot.slane %v246, %v790
        %v792 = vadd.f32 %v784, %v791
        %v793 = vadd.f32 %v785, %v791
        %v794 = vadd.f32 %v786, %v791
        %v795 = vadd.f32 %v787, %v791
        %v796 = vmax.f32 %v792, 0.0
        %v797 = vmax.f32 %v793, 0.0
        %v798 = vmax.f32 %v794, 0.0
        %v799 = vmax.f32 %v795, 0.0
        %v800 = vld [vmem:[%s3] sm:$0xff]
        %v801 = vld [vmem:[%s3 + $0x8] sm:$0xff]
        %v802 = vld [vmem:[%s3 + $0x10] sm:$0xff]
        %v803 = vld [vmem:[%s3 + $0x18] sm:$0xff]
        %v804 = vld [vmem:[%s3 + $0x20] sm:$0xff]
        %v805 = vld [vmem:[%s3 + $0x28] sm:$0xff]
        %v806 = vld [vmem:[%s3 + $0x30] sm:$0xff]
        %v807 = vld [vmem:[%s3 + $0x38] sm:$0xff]
        %v808 = vld [vmem:[%s3 + $0x40] sm:$0xff]
        %v809 = vld [vmem:[%s3 + $0x48] sm:$0xff]
        %v810 = vld [vmem:[%s3 + $0x50] sm:$0xff]
        %v811 = vld [vmem:[%s3 + $0x58] sm:$0xff]
        %v812 = vld [vmem:[%s3 + $0x60] sm:$0xff]
        %v813 = vld [vmem:[%s3 + $0x68] sm:$0xff]
        %v814 = vld [vmem:[%s3 + $0x70] sm:$0xff]
        %v815 = vld [vmem:[%s3 + $0x78] sm:$0xff]
        %v816 = vlaneseq
        %v817 = vshrl.u32 %v816, 7
        %v818 = vsub.s32 4, %v817
        %v819 = vrot.slane %v246, %v818
        %820 = vmatprep.subr.mxu0 0.0
        %821 = vmatpush1.msra.mxu0 %v800
        %822 = vmatprep.subr.mxu0 0.0
        %823 = vmatpush1.msra.mxu0 %v801
        %824 = vmatprep.subr.mxu0 0.0
        %825 = vmatpush1.msra.mxu0 %v802
        %826 = vmatprep.subr.mxu0 0.0
        %827 = vmatpush1.msra.mxu0 %v803
        %828 = vmatprep.subr.mxu0 0.0
        %829 = vmatpush1.msra.mxu0 %v804
        %830 = vmatprep.subr.mxu0 0.0
        %831 = vmatpush1.msra.mxu0 %v805
        %832 = vmatprep.subr.mxu0 0.0
        %833 = vmatpush1.msra.mxu0 %v806
        %834 = vmatprep.subr.mxu0 0.0
        %835 = vmatpush1.msra.mxu0 %v807
        %836 = vmatprep.subr.mxu0 0.0
        %837 = vmatpush1.msra.mxu0 %v808
        %838 = vmatprep.subr.mxu0 0.0
        %839 = vmatpush1.msra.mxu0 %v809
        %840 = vmatprep.subr.mxu0 0.0
        %841 = vmatpush1.msra.mxu0 %v810
        %842 = vmatprep.subr.mxu0 0.0
        %843 = vmatpush1.msra.mxu0 %v811
        %844 = vmatprep.subr.mxu0 0.0
        %845 = vmatpush1.msra.mxu0 %v812
        %846 = vmatprep.subr.mxu0 0.0
        %847 = vmatpush1.msra.mxu0 %v813
        %848 = vmatprep.subr.mxu0 0.0
        %849 = vmatpush1.msra.mxu0 %v814
        %850 = vmatprep.subr.mxu0 0.0
        %851 = vmatpush1.msra.mxu0 %v815
        %852 = vmatprep.subr.mxu0 0.0
        %853 = vmatpush1.msra.mxu0 0.0
        %854 = vmatprep.subr.mxu0 0.0
        %855 = vmatpush1.msra.mxu0 0.0
        %856 = vmatprep.subr.mxu0 0.0
        %857 = vmatpush1.msra.mxu0 0.0
        %858 = vmatprep.subr.mxu0 0.0
        %859 = vmatpush1.msra.mxu0 0.0
        %860 = vmatprep.subr.mxu0 0.0
        %861 = vmatpush1.msra.mxu0 0.0
        %862 = vmatprep.subr.mxu0 0.0
        %863 = vmatpush1.msra.mxu0 0.0
        %864 = vmatprep.subr.mxu0 0.0
        %865 = vmatpush1.msra.mxu0 0.0
        %866 = vmatprep.subr.mxu0 0.0
        %867 = vmatpush1.msra.mxu0 0.0
        %868 = vmatprep.subr.mxu0 0.0
        %869 = vmatpush1.msra.mxu0 0.0
        %870 = vmatprep.subr.mxu0 0.0
        %871 = vmatpush1.msra.mxu0 0.0
        %872 = vmatprep.subr.mxu0 0.0
        %873 = vmatpush1.msra.mxu0 0.0
        %874 = vmatprep.subr.mxu0 0.0
        %875 = vmatpush1.msra.mxu0 0.0
        %876 = vmatprep.subr.mxu0 0.0
        %877 = vmatpush1.msra.mxu0 0.0
        %878 = vmatprep.subr.mxu0 0.0
        %879 = vmatpush1.msra.mxu0 0.0
        %880 = vmatprep.subr.mxu0 0.0
        %881 = vmatpush1.msra.mxu0 0.0
        %882 = vmatprep.subr.mxu0 0.0
        %883 = vmatpush1.msra.mxu0 0.0
        %884 = vmatprep.mubr.f32.mxu0 0.0
        %885 = vmatmul.mubr.f32.gmra.mrb[0].mxu0 %v796
        %v886 = vpop.f32.mrb[0].mxu0
        %v887 = vadd.f32 %v819, %v886
        %v888 = vpop.f32.mrb[0].mxu0
        %889 = vmatprep.mubr.f32.mxu0 0.0
        %890 = vmatmul.mubr.f32.gmra.mrb[0].mxu0 %v797
        %v891 = vpop.f32.mrb[0].mxu0
        %v892 = vadd.f32 %v819, %v891
        %v893 = vpop.f32.mrb[0].mxu0
        %894 = vmatprep.mubr.f32.mxu0 0.0
        %895 = vmatmul.mubr.f32.gmra.mrb[0].mxu0 %v798
        %v896 = vpop.f32.mrb[0].mxu0
        %v897 = vadd.f32 %v819, %v896
        %v898 = vpop.f32.mrb[0].mxu0
        %899 = vmatprep.mubr.f32.mxu0 0.0
        %900 = vmatmul.mubr.f32.gmra.mrb[0].mxu0 %v799
        %v901 = vpop.f32.mrb[0].mxu0
        %v902 = vadd.f32 %v819, %v901
        %v903 = vpop.f32.mrb[0].mxu0
        %904 = vdwg.mxu0
        %v905 = vmax.f32 %v887, 0.0
        %v906 = vmax.f32 %v892, 0.0
        %v907 = vmax.f32 %v897, 0.0
        %v908 = vmax.f32 %v902, 0.0
        %v909 = vlaneseq
        %v910 = vshrl.u32 %v909, 7
        %v911 = vsub.s32 5, %v910
        %v912 = vrot.slane %v246, %v911
        %v913 = vmul.f32 %v905, %v912
        %v914 = vmul.f32 %v906, %v912
        %v915 = vmul.f32 %v907, %v912
        %v916 = vmul.f32 %v908, %v912
        %vm917 = vcmask 523264
        %v918 = vsel %vm917, %v913, 0.0
        %919 = vadd.xlane.f32.xlu0 %v918
        %v920 = vpop.xlane.xlu0 %919
        %v921 = vsel %vm917, %v914, 0.0
        %922 = vadd.xlane.f32.xlu0 %v921
        %v923 = vpop.xlane.xlu0 %922
        %v924 = vsel %vm917, %v915, 0.0
        %925 = vadd.xlane.f32.xlu0 %v924
        %v926 = vpop.xlane.xlu0 %925
        %v927 = vsel %vm917, %v916, 0.0
        %928 = vadd.xlane.f32.xlu0 %v927
        %v929 = vpop.xlane.xlu0 %928
        %v930 = vadd.f32 %v920, %v912
        %v931 = vadd.f32 %v923, %v912
        %v932 = vadd.f32 %v926, %v912
        %v933 = vadd.f32 %v929, %v912
        %938 = vrot.lane.b32.xlu0 %v930, 64
        %v939 = vpop.permute.xlu0 %938
        %940 = vrot.lane.b32.xlu0 %v931, 64
        %v941 = vpop.permute.xlu0 %940
        %942 = vrot.lane.b32.xlu0 %v932, 64
        %v943 = vpop.permute.xlu0 %942
        %944 = vrot.lane.b32.xlu0 %v933, 64
        %v945 = vpop.permute.xlu0 %944
        %vm950 = vcmask 7168
        %951 = vst.msk [vmem:[%s241] sm:$0xff] %vm950, %v939
        %952 = vst.msk [vmem:[%s241 + $0x8] sm:$0xff] %vm950, %v941
        %953 = vst.msk [vmem:[%s241 + $0x10] sm:$0xff] %vm950, %v943
        %954 = vst.msk [vmem:[%s241 + $0x18] sm:$0xff] %vm950, %v945
        %p955 = scmp.lt.s32.totalorder %s17, 1
        %s956 = scalar_select %p955, %s17, 1
        %s957 = smul.addr %s956, 4
        %s958 = smul.addr %s957, 8
        %s959 = scalar_lea.vmem %s5, %s958
        // Predicated region
        $region45: #{tpu_custom_call.1} parent=39 // pred_check
          %p960 = pneg %p145
        $region46: #{tpu_custom_call.1} parent=39 // pred_check_branch
          %962 = sbr.rel (%p960) target = $region48
        $region47: #{tpu_custom_call.1} parent=39 // pred_region
          _
        $region48: #{tpu_custom_call.1} parent=39 // pred_fallthru
          _
      $region40: #{tpu_custom_call.1} parent=5 // pred_fallthru
        _
      %p963 = scmp.le.s32.totalorder 2, %s12
      // Predicated region
      $region49: #{tpu_custom_call.1} parent=5 // pred_check
        %p964 = pneg %p963
      $region50: #{tpu_custom_call.1} parent=5 // pred_check_branch
        %966 = sbr.rel (%p964) target = $region52
      $region51: #{tpu_custom_call.1} parent=5 // pred_region
        %s967 = ssub.s32 %s12, 2
        // Predicated region
        $region53: #{tpu_custom_call.1} parent=51 // pred_check
          %p968 = pneg %p151
        $region54: #{tpu_custom_call.1} parent=51 // pred_check_branch
          %970 = sbr.rel (%p968) target = $region56
        $region55: #{tpu_custom_call.1} parent=51 // pred_region
          %p971 = scmp.lt.s32.totalorder %s18, 1
          %s972 = scalar_select %p971, %s18, 1
          %s973 = smul.addr %s972, 4
          %s974 = smul.addr %s973, 8
          %s975 = scalar_lea.vmem %s5, %s974
        $region56: #{tpu_custom_call.1} parent=51 // pred_fallthru
          _
      $region52: #{tpu_custom_call.1} parent=5 // pred_fallthru
        _
    $region6: #{tpu_custom_call.1} parent=1 // loop_footer
      %s16 = sadd.s32 1, %s12
    $region7: #{tpu_custom_call.1} parent=1 // loop_footer_branch
      %11 = sbr.rel target = $region3
    $region8: #{tpu_custom_call.1} parent=1 // loop_exit
      _
    %976 = vsyncpa [#allocation3], 1
    %s977 = scalar_lea.sflag [#allocation3], 1
    %978 = vsyncpa %s977, 1

</llo_original>
